<compile_context>
chip_gen: v6e
topology: v6e:2x2x1
jax: 0.10.0
libtpu: 0.0.40
codegen_flags: <defaults>
</compile_context>

<pallas_src>
import functools

import jax
import jax.numpy as jnp
from jax.experimental import pallas as pl
from jax.experimental.pallas import tpu as pltpu  # noqa: F401  (kept for parity/extension)


def _round_up(n, m):
    return ((n + m - 1) // m) * m


def _rnn_kernel(x_ref, wih_ref, whh_ref, b_ref, fcw_ref, fcb_ref, out_ref, *, seq_len):
    """Fused RNN forward in a single invocation.

    x_ref   : (T*B, Dp)  time-major inputs, flattened over (T, B), lane-padded
    wih_ref : (Dp, Hp)   W_ih^T, zero-padded
    whh_ref : (Hp, Hp)   W_hh^T, zero-padded
    b_ref   : (1, Hp)    b_ih + b_hh, zero-padded
    fcw_ref : (Hp, Op)   W_fc^T, zero-padded
    fcb_ref : (1, Op)    b_fc, zero-padded
    out_ref : (B, Op)
    """
    batch = out_ref.shape[0]

    # Input projection for all timesteps at once (no serial dependence):
    # one well-shaped MXU matmul instead of T tiny ones.
    u = jnp.dot(x_ref[...], wih_ref[...], preferred_element_type=jnp.float32) + b_ref[...]

    whh = whh_ref[...]
    h = jnp.zeros((batch, whh.shape[0]), jnp.float32)

    # Serial tanh recurrence, fully unrolled (seq_len is static and tiny).
    for t in range(seq_len):
        u_t = u[t * batch:(t + 1) * batch, :]
        h = jnp.tanh(u_t + jnp.dot(h, whh, preferred_element_type=jnp.float32))

    # Fused FC head on the last hidden state (lane-dense (B, Op) store).
    out_ref[...] = (
        jnp.dot(h, fcw_ref[...], preferred_element_type=jnp.float32) + fcb_ref[...]
    ).astype(out_ref.dtype)


def prepare_params(w_ih, w_hh, b_ih, b_hh, fc_w, fc_b):
    """One-time parameter prep: transpose + zero-pad to lane-dense (multiples of 128)."""
    H, D = w_ih.shape
    O = fc_w.shape[0]
    Dp, Hp, Op = _round_up(D, 128), _round_up(H, 128), _round_up(O, 128)

    wih_p = jnp.zeros((Dp, Hp), jnp.float32).at[:D, :H].set(w_ih.T)
    whh_p = jnp.zeros((Hp, Hp), jnp.float32).at[:H, :H].set(w_hh.T)
    b_p = jnp.zeros((1, Hp), jnp.float32).at[0, :H].set(b_ih + b_hh)
    fcw_p = jnp.zeros((Hp, Op), jnp.float32).at[:H, :O].set(fc_w.T)
    fcb_p = jnp.zeros((1, Op), jnp.float32).at[0, :O].set(fc_b)
    return wih_p, whh_p, b_p, fcw_p, fcb_p


@functools.partial(jax.jit, static_argnames=("out_dim",))
def rnn_model_forward(x_btd, wih_p, whh_p, b_p, fcw_p, fcb_p, *, out_dim):
    """x_btd: (B, T, D_in) batch-first (PyTorch convention). Returns (B, out_dim)."""
    B, T, D = x_btd.shape
    Dp = wih_p.shape[0]
    Hp = whh_p.shape[0]
    Op = fcb_p.shape[1]

    # batch-first -> time-major, flatten (T, B), zero-pad feature (lane) dim.
    x_tb = jnp.transpose(x_btd, (1, 0, 2)).reshape(T * B, D).astype(jnp.float32)
    x_pad = jnp.pad(x_tb, ((0, 0), (0, Dp - D)))

    kernel = functools.partial(_rnn_kernel, seq_len=T)

    out_p = pl.pallas_call(
        kernel,
        out_shape=jax.ShapeDtypeStruct((B, Op), jnp.float32),
        # Single invocation (no grid): everything resident in VMEM, one DMA each.
        in_specs=[
            pl.BlockSpec((T * B, Dp), lambda: (0, 0)),   # x (all timesteps)
            pl.BlockSpec((Dp, Hp), lambda: (0, 0)),      # W_ih^T
            pl.BlockSpec((Hp, Hp), lambda: (0, 0)),      # W_hh^T
            pl.BlockSpec((1, Hp), lambda: (0, 0)),       # b_ih + b_hh
            pl.BlockSpec((Hp, Op), lambda: (0, 0)),      # W_fc^T
            pl.BlockSpec((1, Op), lambda: (0, 0)),       # b_fc
        ],
        out_specs=pl.BlockSpec((B, Op), lambda: (0, 0)),
    )(x_pad, wih_p, whh_p, b_p, fcw_p, fcb_p)

    return out_p[:, :out_dim]


def _reference_forward(x_btd, w_ih, w_hh, b_ih, b_hh, fc_w, fc_b):
    """Pure-JAX reference matching torch.nn.RNN(batch_first=True) + Linear."""
    B, T, D = x_btd.shape
    H = w_hh.shape[0]
    h = jnp.zeros((B, H), jnp.float32)
    for t in range(T):
        x_t = x_btd[:, t, :]
        h = jnp.tanh(x_t @ w_ih.T + b_ih + h @ w_hh.T + b_hh)
    return h @ fc_w.T + fc_b


if __name__ == "__main__":
    # small shapes consistent with the module's forward
    B, T, D_in, H, O = 2, 8, 4, 32, 3

    key = jax.random.PRNGKey(0)
    ks = jax.random.split(key, 7)
    bound_rnn = 1.0 / jnp.sqrt(H)
    bound_fc = 1.0 / jnp.sqrt(H)

    # deterministic parameter init (PyTorch-style uniform ranges, synthetic values)
    w_ih = jax.random.uniform(ks[0], (H, D_in), jnp.float32, -bound_rnn, bound_rnn)
    w_hh = jax.random.uniform(ks[1], (H, H), jnp.float32, -bound_rnn, bound_rnn)
    b_ih = jax.random.uniform(ks[2], (H,), jnp.float32, -bound_rnn, bound_rnn)
    b_hh = jax.random.uniform(ks[3], (H,), jnp.float32, -bound_rnn, bound_rnn)
    fc_w = jax.random.uniform(ks[4], (O, H), jnp.float32, -bound_fc, bound_fc)
    fc_b = jax.random.uniform(ks[5], (O,), jnp.float32, -bound_fc, bound_fc)

    x = jax.random.normal(ks[6], (B, T, D_in), jnp.float32)

    # one-time parameter prep (transpose + pad), outside the jitted forward
    prepped = prepare_params(w_ih, w_hh, b_ih, b_hh, fc_w, fc_b)

    out = rnn_model_forward(x, *prepped, out_dim=O)
    out = jax.block_until_ready(out)

    ref = _reference_forward(x, w_ih, w_hh, b_ih, b_hh, fc_w, fc_b)
    assert out.shape == (B, O)
    assert jnp.allclose(out, ref, atol=1e-4, rtol=1e-4), "Pallas output mismatch"

    print("KERNEL_OK")
</pallas_src>

<mosaic_0001>
module attributes {stable_mosaic.version = 11 : i64} {
  func.func @_rnn_kernel(%arg0: memref<16x128xf32, #tpu.memory_space<vmem>>, %arg1: memref<128x128xf32, #tpu.memory_space<vmem>>, %arg2: memref<128x128xf32, #tpu.memory_space<vmem>>, %arg3: memref<1x128xf32, #tpu.memory_space<vmem>>, %arg4: memref<128x128xf32, #tpu.memory_space<vmem>>, %arg5: memref<1x128xf32, #tpu.memory_space<vmem>>, %arg6: memref<2x128xf32, #tpu.memory_space<vmem>>) attributes {dimension_semantics = [], scalar_prefetch = 0 : i64, scratch_operands = 0 : i64, tpu.core_type = #tpu.core_type<tc>} {
    %c0 = arith.constant 0 : index
    %c0_0 = arith.constant 0 : index
    %0 = vector.load %arg0[%c0, %c0_0] : memref<16x128xf32, #tpu.memory_space<vmem>>, vector<16x128xf32>
    %c0_1 = arith.constant 0 : index
    %c0_2 = arith.constant 0 : index
    %1 = vector.load %arg1[%c0_1, %c0_2] : memref<128x128xf32, #tpu.memory_space<vmem>>, vector<128x128xf32>
    %cst = arith.constant dense<0.000000e+00> : vector<16x128xf32>
    %2 = tpu.matmul %0, %1, %cst {dimension_numbers = #tpu.dot_dimension_numbers<[1], [0], [0], [1], [0, 0, 1, 1], [], []>} : vector<16x128xf32>, vector<128x128xf32>, vector<16x128xf32> -> vector<16x128xf32>
    %c0_3 = arith.constant 0 : index
    %c0_4 = arith.constant 0 : index
    %3 = vector.load %arg3[%c0_3, %c0_4] : memref<1x128xf32, #tpu.memory_space<vmem>>, vector<1x128xf32>
    %4 = vector.broadcast %3 : vector<1x128xf32> to vector<16x128xf32>
    %5 = arith.addf %2, %4 : vector<16x128xf32>
    %c0_5 = arith.constant 0 : index
    %c0_6 = arith.constant 0 : index
    %6 = vector.load %arg2[%c0_5, %c0_6] : memref<128x128xf32, #tpu.memory_space<vmem>>, vector<128x128xf32>
    %cst_7 = arith.constant 0.000000e+00 : f32
    %7 = vector.broadcast %cst_7 : f32 to vector<2x128xf32>
    %8 = vector.extract_strided_slice %5 {offsets = [0, 0], sizes = [2, 128], strides = [1, 1]} : vector<16x128xf32> to vector<2x128xf32>
    %cst_8 = arith.constant dense<0.000000e+00> : vector<2x128xf32>
    %9 = tpu.matmul %7, %6, %cst_8 {dimension_numbers = #tpu.dot_dimension_numbers<[1], [0], [0], [1], [0, 0, 1, 1], [], []>} : vector<2x128xf32>, vector<128x128xf32>, vector<2x128xf32> -> vector<2x128xf32>
    %10 = arith.addf %8, %9 : vector<2x128xf32>
    %11 = math.tanh %10 : vector<2x128xf32>
    %12 = vector.extract_strided_slice %5 {offsets = [2, 0], sizes = [2, 128], strides = [1, 1]} : vector<16x128xf32> to vector<2x128xf32>
    %cst_9 = arith.constant dense<0.000000e+00> : vector<2x128xf32>
    %13 = tpu.matmul %11, %6, %cst_9 {dimension_numbers = #tpu.dot_dimension_numbers<[1], [0], [0], [1], [0, 0, 1, 1], [], []>} : vector<2x128xf32>, vector<128x128xf32>, vector<2x128xf32> -> vector<2x128xf32>
    %14 = arith.addf %12, %13 : vector<2x128xf32>
    %15 = math.tanh %14 : vector<2x128xf32>
    %16 = vector.extract_strided_slice %5 {offsets = [4, 0], sizes = [2, 128], strides = [1, 1]} : vector<16x128xf32> to vector<2x128xf32>
    %cst_10 = arith.constant dense<0.000000e+00> : vector<2x128xf32>
    %17 = tpu.matmul %15, %6, %cst_10 {dimension_numbers = #tpu.dot_dimension_numbers<[1], [0], [0], [1], [0, 0, 1, 1], [], []>} : vector<2x128xf32>, vector<128x128xf32>, vector<2x128xf32> -> vector<2x128xf32>
    %18 = arith.addf %16, %17 : vector<2x128xf32>
    %19 = math.tanh %18 : vector<2x128xf32>
    %20 = vector.extract_strided_slice %5 {offsets = [6, 0], sizes = [2, 128], strides = [1, 1]} : vector<16x128xf32> to vector<2x128xf32>
    %cst_11 = arith.constant dense<0.000000e+00> : vector<2x128xf32>
    %21 = tpu.matmul %19, %6, %cst_11 {dimension_numbers = #tpu.dot_dimension_numbers<[1], [0], [0], [1], [0, 0, 1, 1], [], []>} : vector<2x128xf32>, vector<128x128xf32>, vector<2x128xf32> -> vector<2x128xf32>
    %22 = arith.addf %20, %21 : vector<2x128xf32>
    %23 = math.tanh %22 : vector<2x128xf32>
    %24 = vector.extract_strided_slice %5 {offsets = [8, 0], sizes = [2, 128], strides = [1, 1]} : vector<16x128xf32> to vector<2x128xf32>
    %cst_12 = arith.constant dense<0.000000e+00> : vector<2x128xf32>
    %25 = tpu.matmul %23, %6, %cst_12 {dimension_numbers = #tpu.dot_dimension_numbers<[1], [0], [0], [1], [0, 0, 1, 1], [], []>} : vector<2x128xf32>, vector<128x128xf32>, vector<2x128xf32> -> vector<2x128xf32>
    %26 = arith.addf %24, %25 : vector<2x128xf32>
    %27 = math.tanh %26 : vector<2x128xf32>
    %28 = vector.extract_strided_slice %5 {offsets = [10, 0], sizes = [2, 128], strides = [1, 1]} : vector<16x128xf32> to vector<2x128xf32>
    %cst_13 = arith.constant dense<0.000000e+00> : vector<2x128xf32>
    %29 = tpu.matmul %27, %6, %cst_13 {dimension_numbers = #tpu.dot_dimension_numbers<[1], [0], [0], [1], [0, 0, 1, 1], [], []>} : vector<2x128xf32>, vector<128x128xf32>, vector<2x128xf32> -> vector<2x128xf32>
    %30 = arith.addf %28, %29 : vector<2x128xf32>
    %31 = math.tanh %30 : vector<2x128xf32>
    %32 = vector.extract_strided_slice %5 {offsets = [12, 0], sizes = [2, 128], strides = [1, 1]} : vector<16x128xf32> to vector<2x128xf32>
    %cst_14 = arith.constant dense<0.000000e+00> : vector<2x128xf32>
    %33 = tpu.matmul %31, %6, %cst_14 {dimension_numbers = #tpu.dot_dimension_numbers<[1], [0], [0], [1], [0, 0, 1, 1], [], []>} : vector<2x128xf32>, vector<128x128xf32>, vector<2x128xf32> -> vector<2x128xf32>
    %34 = arith.addf %32, %33 : vector<2x128xf32>
    %35 = math.tanh %34 : vector<2x128xf32>
    %36 = vector.extract_strided_slice %5 {offsets = [14, 0], sizes = [2, 128], strides = [1, 1]} : vector<16x128xf32> to vector<2x128xf32>
    %cst_15 = arith.constant dense<0.000000e+00> : vector<2x128xf32>
    %37 = tpu.matmul %35, %6, %cst_15 {dimension_numbers = #tpu.dot_dimension_numbers<[1], [0], [0], [1], [0, 0, 1, 1], [], []>} : vector<2x128xf32>, vector<128x128xf32>, vector<2x128xf32> -> vector<2x128xf32>
    %38 = arith.addf %36, %37 : vector<2x128xf32>
    %39 = math.tanh %38 : vector<2x128xf32>
    %c0_16 = arith.constant 0 : index
    %c0_17 = arith.constant 0 : index
    %40 = vector.load %arg4[%c0_16, %c0_17] : memref<128x128xf32, #tpu.memory_space<vmem>>, vector<128x128xf32>
    %cst_18 = arith.constant dense<0.000000e+00> : vector<2x128xf32>
    %41 = tpu.matmul %39, %40, %cst_18 {dimension_numbers = #tpu.dot_dimension_numbers<[1], [0], [0], [1], [0, 0, 1, 1], [], []>} : vector<2x128xf32>, vector<128x128xf32>, vector<2x128xf32> -> vector<2x128xf32>
    %c0_19 = arith.constant 0 : index
    %c0_20 = arith.constant 0 : index
    %42 = vector.load %arg5[%c0_19, %c0_20] : memref<1x128xf32, #tpu.memory_space<vmem>>, vector<1x128xf32>
    %43 = vector.broadcast %42 : vector<1x128xf32> to vector<2x128xf32>
    %44 = arith.addf %41, %43 : vector<2x128xf32>
    %c0_21 = arith.constant 0 : index
    %c0_22 = arith.constant 0 : index
    %45 = vector.load %arg6[%c0_21, %c0_22] : memref<2x128xf32, #tpu.memory_space<vmem>>, vector<2x128xf32>
    tpu.vector_store %arg6[%c0_21, %c0_22], %44 {strides = array<i32>} : memref<2x128xf32, #tpu.memory_space<vmem>>, vector<2x128xf32>,
    return
  }
}

</mosaic_0001>

<llo_original>
// kernel: rnn_model_forward.1
$region0: #{rnn_model_forward.1}
  #allocation0 [shape = 'u32[]', space=smem, size = 0x4, offset = 0x4, fixed_abs, tag = 'smem constant byte address 0x4 - core index']
  #allocation1 [shape = 'u32[144,128]{1,0:T(1,128)}', space=vmem, size = 0x12000, scoped, tag = 'internal scratch']
  %s0 = inlined_call_operand.vmem [shape: f32[16,128], index: 0, kind: input, shape index: {}]
  %s1 = inlined_call_operand.hbm [shape: f32[128,128], index: 1, kind: input, shape index: {}]
  %s2 = inlined_call_operand.hbm [shape: f32[128,128], index: 2, kind: input, shape index: {}]
  %s3 = inlined_call_operand.vmem [shape: f32[1,128], index: 3, kind: input, shape index: {}]
  %s4 = inlined_call_operand.hbm [shape: f32[128,128], index: 4, kind: input, shape index: {}]
  %s5 = inlined_call_operand.vmem [shape: f32[1,128], index: 5, kind: input, shape index: {}]
  %s6 = inlined_call_operand.hbm [shape: f32[2,128], index: 6, kind: output, shape index: {}]
  %s7 = sld [smem:[#allocation0]]
  $region46: #{rnn_model_forward.1} parent=0
    _
  %s9 = ssub.s32 1, %s7
  %s10 = scalar_select 0, %s9, %s7
  $region1: #{rnn_model_forward.1} parent=0
    #allocation2 [shape = 'u8[65536]{0}', space=vmem, size = 0x10000, scoped, tag = 'input window, operand 1, single buffered']
    #allocation3 [shape = 's32[1]{0}', space=sflag, size = 0x4, scoped, tag = 'scoped memory for rnn_model_forward.1']
    #allocation4 [shape = 's32[1]{0}', space=sflag, size = 0x4, scoped, tag = 'scoped memory for rnn_model_forward.1']
    #allocation5 [shape = 'u8[65536]{0}', space=vmem, size = 0x10000, scoped, tag = 'input window, operand 2, single buffered']
    #allocation6 [shape = 's32[1]{0}', space=sflag, size = 0x4, scoped, tag = 'scoped memory for rnn_model_forward.1']
    #allocation7 [shape = 'u8[65536]{0}', space=vmem, size = 0x10000, scoped, tag = 'input window, operand 4, single buffered']
    #allocation8 [shape = 'u8[1024]{0}', space=vmem, size = 0x400, scoped, tag = 'output window, operand 0, single buffered']
    %11 = vsyncpa [#allocation3], 0
    %12 = vsyncpa [#allocation6], 0
    %13 = vsyncpa [#allocation4], 0
    // Predicated region
    $region2: #{rnn_model_forward.1} parent=1 // pred_check
      _
    $region3: #{rnn_model_forward.1} parent=1 // pred_check_branch
      %15 = sbr.rel (0) target = $region5
    $region4: #{rnn_model_forward.1} parent=1 // pred_region
      _
    $region5: #{rnn_model_forward.1} parent=1 // pred_fallthru
      _
    // Predicated region
    $region6: #{rnn_model_forward.1} parent=1 // pred_check
      _
    $region7: #{rnn_model_forward.1} parent=1 // pred_check_branch
      %17 = sbr.rel (0) target = $region9
    $region8: #{rnn_model_forward.1} parent=1 // pred_region
      %s19 = ssub.s32 2048, 2048
      %20 = vsyncadd [#allocation3], %s19
      %s21 = sshll.u32 [#allocation2], 4
      %s22 = int_to_ptr.vmem [resolvable:$true] %s21
      %27 = dma.hbm_to_vmem [thread:$0]  %s1, 2048, %s22, [#allocation3], 128, 128, 8
    $region9: #{rnn_model_forward.1} parent=1 // pred_fallthru
      _
    // Predicated region
    $region10: #{rnn_model_forward.1} parent=1 // pred_check
      _
    $region11: #{rnn_model_forward.1} parent=1 // pred_check_branch
      %29 = sbr.rel (0) target = $region13
    $region12: #{rnn_model_forward.1} parent=1 // pred_region
      %s31 = ssub.s32 2048, 2048
      %32 = vsyncadd [#allocation6], %s31
      %s33 = sshll.u32 [#allocation5], 4
      %s34 = int_to_ptr.vmem [resolvable:$true] %s33
      %39 = dma.hbm_to_vmem [thread:$0]  %s2, 2048, %s34, [#allocation6], 128, 128, 8
    $region13: #{rnn_model_forward.1} parent=1 // pred_fallthru
      _
    // Predicated region
    $region14: #{rnn_model_forward.1} parent=1 // pred_check
      _
    $region15: #{rnn_model_forward.1} parent=1 // pred_check_branch
      %41 = sbr.rel (0) target = $region17
    $region16: #{rnn_model_forward.1} parent=1 // pred_region
      _
    $region17: #{rnn_model_forward.1} parent=1 // pred_fallthru
      _
    // Predicated region
    $region18: #{rnn_model_forward.1} parent=1 // pred_check
      _
    $region19: #{rnn_model_forward.1} parent=1 // pred_check_branch
      %43 = sbr.rel (0) target = $region21
    $region20: #{rnn_model_forward.1} parent=1 // pred_region
      %s45 = ssub.s32 2048, 2048
      %46 = vsyncadd [#allocation6], %s45
      %s47 = sshll.u32 [#allocation7], 4
      %s48 = int_to_ptr.vmem [resolvable:$true] %s47
      %53 = dma.hbm_to_vmem [thread:$0]  %s4, 2048, %s48, [#allocation6], 128, 128, 8
    $region21: #{rnn_model_forward.1} parent=1 // pred_fallthru
      _
    // Predicated region
    $region22: #{rnn_model_forward.1} parent=1 // pred_check
      _
    $region23: #{rnn_model_forward.1} parent=1 // pred_check_branch
      %55 = sbr.rel (0) target = $region25
    $region24: #{rnn_model_forward.1} parent=1 // pred_region
      _
    $region25: #{rnn_model_forward.1} parent=1 // pred_fallthru
      _
    // Predicated region
    $region26: #{rnn_model_forward.1} parent=1 // pred_check
      _
    $region27: #{rnn_model_forward.1} parent=1 // pred_check_branch
      %57 = sbr.rel (0) target = $region29
    $region28: #{rnn_model_forward.1} parent=1 // pred_region
      %58 = dma.done [#allocation3], 2048
    $region29: #{rnn_model_forward.1} parent=1 // pred_fallthru
      _
    // Predicated region
    $region30: #{rnn_model_forward.1} parent=1 // pred_check
      _
    $region31: #{rnn_model_forward.1} parent=1 // pred_check_branch
      %60 = sbr.rel (0) target = $region33
    $region32: #{rnn_model_forward.1} parent=1 // pred_region
      %61 = dma.done [#allocation6], 2048
    $region33: #{rnn_model_forward.1} parent=1 // pred_fallthru
      _
    // Predicated region
    $region34: #{rnn_model_forward.1} parent=1 // pred_check
      _
    $region35: #{rnn_model_forward.1} parent=1 // pred_check_branch
      %63 = sbr.rel (0) target = $region37
    $region36: #{rnn_model_forward.1} parent=1 // pred_region
      %64 = dma.done [#allocation6], 2048
    $region37: #{rnn_model_forward.1} parent=1 // pred_fallthru
      _
    %v65 = vld [vmem:[%s0] sm:$0xff]
    %v66 = vld [vmem:[%s0 + $0x8] sm:$0xff]
    %v67 = vld [vmem:[#allocation2] sm:$0xff]
    %v68 = vld [vmem:[#allocation2 + $0x8] sm:$0xff]
    %v69 = vld [vmem:[#allocation2 + $0x10] sm:$0xff]
    %v70 = vld [vmem:[#allocation2 + $0x18] sm:$0xff]
    %v71 = vld [vmem:[#allocation2 + $0x20] sm:$0xff]
    %v72 = vld [vmem:[#allocation2 + $0x28] sm:$0xff]
    %v73 = vld [vmem:[#allocation2 + $0x30] sm:$0xff]
    %v74 = vld [vmem:[#allocation2 + $0x38] sm:$0xff]
    %v75 = vld [vmem:[#allocation2 + $0x40] sm:$0xff]
    %v76 = vld [vmem:[#allocation2 + $0x48] sm:$0xff]
    %v77 = vld [vmem:[#allocation2 + $0x50] sm:$0xff]
    %v78 = vld [vmem:[#allocation2 + $0x58] sm:$0xff]
    %v79 = vld [vmem:[#allocation2 + $0x60] sm:$0xff]
    %v80 = vld [vmem:[#allocation2 + $0x68] sm:$0xff]
    %v81 = vld [vmem:[#allocation2 + $0x70] sm:$0xff]
    %v82 = vld [vmem:[#allocation2 + $0x78] sm:$0xff]
    %v83 = vld [vmem:[%s3] sm:$0x1]
    %v85 = vlaneseq
    %v86 = vshrl.u32 %v85, 7
    %v87 = vsub.s32 0, %v86
    %v88 = vrot.slane %v83, %v87
    %90 = vmatprep.subr.mxu0 0.0
    %91 = vmatpush1.msra.mxu0 %v82
    %92 = vmatprep.subr.mxu0 0.0
    %93 = vmatpush1.msra.mxu0 %v81
    %94 = vmatprep.subr.mxu0 0.0
    %95 = vmatpush1.msra.mxu0 %v80
    %96 = vmatprep.subr.mxu0 0.0
    %97 = vmatpush1.msra.mxu0 %v79
    %98 = vmatprep.subr.mxu0 0.0
    %99 = vmatpush1.msra.mxu0 %v78
    %100 = vmatprep.subr.mxu0 0.0
    %101 = vmatpush1.msra.mxu0 %v77
    %102 = vmatprep.subr.mxu0 0.0
    %103 = vmatpush1.msra.mxu0 %v76
    %104 = vmatprep.subr.mxu0 0.0
    %105 = vmatpush1.msra.mxu0 %v75
    %106 = vmatprep.subr.mxu0 0.0
    %107 = vmatpush1.msra.mxu0 %v74
    %108 = vmatprep.subr.mxu0 0.0
    %109 = vmatpush1.msra.mxu0 %v73
    %110 = vmatprep.subr.mxu0 0.0
    %111 = vmatpush1.msra.mxu0 %v72
    %112 = vmatprep.subr.mxu0 0.0
    %113 = vmatpush1.msra.mxu0 %v71
    %114 = vmatprep.subr.mxu0 0.0
    %115 = vmatpush1.msra.mxu0 %v70
    %116 = vmatprep.subr.mxu0 0.0
    %117 = vmatpush1.msra.mxu0 %v69
    %118 = vmatprep.subr.mxu0 0.0
    %119 = vmatpush1.msra.mxu0 %v68
    %120 = vmatprep.subr.mxu0 0.0
    %121 = vmatpush1.msra.mxu0 %v67
    %122 = vmatprep.subr.mxu0 0.0
    %123 = vmatpush2.msra.mxu0 0.0
    %124 = vmatprep.subr.mxu0 0.0
    %125 = vmatpush2.msra.mxu0 0.0
    %126 = vmatprep.subr.mxu0 0.0
    %127 = vmatpush2.msra.mxu0 0.0
    %128 = vmatprep.subr.mxu0 0.0
    %129 = vmatpush2.msra.mxu0 0.0
    %130 = vmatprep.subr.mxu0 0.0
    %131 = vmatpush2.msra.mxu0 0.0
    %132 = vmatprep.subr.mxu0 0.0
    %133 = vmatpush2.msra.mxu0 0.0
    %134 = vmatprep.subr.mxu0 0.0
    %135 = vmatpush2.msra.mxu0 0.0
    %136 = vmatprep.subr.mxu0 0.0
    %137 = vmatpush2.msra.mxu0 0.0
    %138 = vmatprep.subr.mxu0 0.0
    %139 = vmatpush2.msra.mxu0 0.0
    %140 = vmatprep.subr.mxu0 0.0
    %141 = vmatpush2.msra.mxu0 0.0
    %142 = vmatprep.subr.mxu0 0.0
    %143 = vmatpush2.msra.mxu0 0.0
    %144 = vmatprep.subr.mxu0 0.0
    %145 = vmatpush2.msra.mxu0 0.0
    %146 = vmatprep.subr.mxu0 0.0
    %147 = vmatpush2.msra.mxu0 0.0
    %148 = vmatprep.subr.mxu0 0.0
    %149 = vmatpush2.msra.mxu0 0.0
    %150 = vmatprep.subr.mxu0 0.0
    %151 = vmatpush2.msra.mxu0 0.0
    %152 = vmatprep.subr.mxu0 0.0
    %153 = vmatpush2.msra.mxu0 0.0
    %154 = vmatprep.mubr.f32.mxu0 0.0
    %155 = vmatmul.mubr.f32.gmra.mxu0 %v65
    %v156 = vpop.f32.mrf.mxu0
    %v157 = vadd.f32 %v88, %v156
    %v158 = vpop.f32.mrf.mxu0
    %159 = vmatprep.mubr.f32.mxu0 0.0
    %160 = vmatmul.mubr.f32.gmra.mxu0 %v66
    %v161 = vpop.f32.mrf.mxu0
    %v162 = vadd.f32 %v88, %v161
    %v163 = vpop.f32.mrf.mxu0
    %164 = vdwg.mxu0
    %v165 = vld [vmem:[#allocation5] sm:$0xff]
    %v166 = vld [vmem:[#allocation5 + $0x8] sm:$0xff]
    %v167 = vld [vmem:[#allocation5 + $0x10] sm:$0xff]
    %v168 = vld [vmem:[#allocation5 + $0x18] sm:$0xff]
    %v169 = vld [vmem:[#allocation5 + $0x20] sm:$0xff]
    %v170 = vld [vmem:[#allocation5 + $0x28] sm:$0xff]
    %v171 = vld [vmem:[#allocation5 + $0x30] sm:$0xff]
    %v172 = vld [vmem:[#allocation5 + $0x38] sm:$0xff]
    %v173 = vld [vmem:[#allocation5 + $0x40] sm:$0xff]
    %v174 = vld [vmem:[#allocation5 + $0x48] sm:$0xff]
    %v175 = vld [vmem:[#allocation5 + $0x50] sm:$0xff]
    %v176 = vld [vmem:[#allocation5 + $0x58] sm:$0xff]
    %v177 = vld [vmem:[#allocation5 + $0x60] sm:$0xff]
    %v178 = vld [vmem:[#allocation5 + $0x68] sm:$0xff]
    %v179 = vld [vmem:[#allocation5 + $0x70] sm:$0xff]
    %v180 = vld [vmem:[#allocation5 + $0x78] sm:$0xff]
    %181 = vmatprep.subr.mxu0 0.0
    %182 = vmatpush1.msra.mxu0 %v180
    %183 = vmatprep.subr.mxu0 0.0
    %184 = vmatpush1.msra.mxu0 %v179
    %185 = vmatprep.subr.mxu0 0.0
    %186 = vmatpush1.msra.mxu0 %v178
    %187 = vmatprep.subr.mxu0 0.0
    %188 = vmatpush1.msra.mxu0 %v177
    %189 = vmatprep.subr.mxu0 0.0
    %190 = vmatpush1.msra.mxu0 %v176
    %191 = vmatprep.subr.mxu0 0.0
    %192 = vmatpush1.msra.mxu0 %v175
    %193 = vmatprep.subr.mxu0 0.0
    %194 = vmatpush1.msra.mxu0 %v174
    %195 = vmatprep.subr.mxu0 0.0
    %196 = vmatpush1.msra.mxu0 %v173
    %197 = vmatprep.subr.mxu0 0.0
    %198 = vmatpush1.msra.mxu0 %v172
    %199 = vmatprep.subr.mxu0 0.0
    %200 = vmatpush1.msra.mxu0 %v171
    %201 = vmatprep.subr.mxu0 0.0
    %202 = vmatpush1.msra.mxu0 %v170
    %203 = vmatprep.subr.mxu0 0.0
    %204 = vmatpush1.msra.mxu0 %v169
    %205 = vmatprep.subr.mxu0 0.0
    %206 = vmatpush1.msra.mxu0 %v168
    %207 = vmatprep.subr.mxu0 0.0
    %208 = vmatpush1.msra.mxu0 %v167
    %209 = vmatprep.subr.mxu0 0.0
    %210 = vmatpush1.msra.mxu0 %v166
    %211 = vmatprep.subr.mxu0 0.0
    %212 = vmatpush1.msra.mxu0 %v165
    %213 = vmatprep.subr.mxu0 0.0
    %214 = vmatpush2.msra.mxu0 0.0
    %215 = vmatprep.subr.mxu0 0.0
    %216 = vmatpush2.msra.mxu0 0.0
    %217 = vmatprep.subr.mxu0 0.0
    %218 = vmatpush2.msra.mxu0 0.0
    %219 = vmatprep.subr.mxu0 0.0
    %220 = vmatpush2.msra.mxu0 0.0
    %221 = vmatprep.subr.mxu0 0.0
    %222 = vmatpush2.msra.mxu0 0.0
    %223 = vmatprep.subr.mxu0 0.0
    %224 = vmatpush2.msra.mxu0 0.0
    %225 = vmatprep.subr.mxu0 0.0
    %226 = vmatpush2.msra.mxu0 0.0
    %227 = vmatprep.subr.mxu0 0.0
    %228 = vmatpush2.msra.mxu0 0.0
    %229 = vmatprep.subr.mxu0 0.0
    %230 = vmatpush2.msra.mxu0 0.0
    %231 = vmatprep.subr.mxu0 0.0
    %232 = vmatpush2.msra.mxu0 0.0
    %233 = vmatprep.subr.mxu0 0.0
    %234 = vmatpush2.msra.mxu0 0.0
    %235 = vmatprep.subr.mxu0 0.0
    %236 = vmatpush2.msra.mxu0 0.0
    %237 = vmatprep.subr.mxu0 0.0
    %238 = vmatpush2.msra.mxu0 0.0
    %239 = vmatprep.subr.mxu0 0.0
    %240 = vmatpush2.msra.mxu0 0.0
    %241 = vmatprep.subr.mxu0 0.0
    %242 = vmatpush2.msra.mxu0 0.0
    %243 = vmatprep.subr.mxu0 0.0
    %244 = vmatpush2.msra.mxu0 0.0
    %245 = vmatprep.mubr.f32.mxu0 0.0
    %246 = vmatmul.mubr.f32.gmra.mxu0 0.0
    %v247 = vpop.f32.mrf.mxu0
    %v248 = vadd.f32 0.0, %v247
    %v249 = vpop.f32.mrf.mxu0
    %250 = vdwg.mxu0
    %v251 = vadd.f32 %v157, %v248
    %v252 = vtanh.pop %v251
    %253 = vmatprep.subr.mxu0 0.0
    %254 = vmatpush1.msra.mxu0 %v180
    %255 = vmatprep.subr.mxu0 0.0
    %256 = vmatpush1.msra.mxu0 %v179
    %257 = vmatprep.subr.mxu0 0.0
    %258 = vmatpush1.msra.mxu0 %v178
    %259 = vmatprep.subr.mxu0 0.0
    %260 = vmatpush1.msra.mxu0 %v177
    %261 = vmatprep.subr.mxu0 0.0
    %262 = vmatpush1.msra.mxu0 %v176
    %263 = vmatprep.subr.mxu0 0.0
    %264 = vmatpush1.msra.mxu0 %v175
    %265 = vmatprep.subr.mxu0 0.0
    %266 = vmatpush1.msra.mxu0 %v174
    %267 = vmatprep.subr.mxu0 0.0
    %268 = vmatpush1.msra.mxu0 %v173
    %269 = vmatprep.subr.mxu0 0.0
    %270 = vmatpush1.msra.mxu0 %v172
    %271 = vmatprep.subr.mxu0 0.0
    %272 = vmatpush1.msra.mxu0 %v171
    %273 = vmatprep.subr.mxu0 0.0
    %274 = vmatpush1.msra.mxu0 %v170
    %275 = vmatprep.subr.mxu0 0.0
    %276 = vmatpush1.msra.mxu0 %v169
    %277 = vmatprep.subr.mxu0 0.0
    %278 = vmatpush1.msra.mxu0 %v168
    %279 = vmatprep.subr.mxu0 0.0
    %280 = vmatpush1.msra.mxu0 %v167
    %281 = vmatprep.subr.mxu0 0.0
    %282 = vmatpush1.msra.mxu0 %v166
    %283 = vmatprep.subr.mxu0 0.0
    %284 = vmatpush1.msra.mxu0 %v165
    %285 = vmatprep.subr.mxu0 0.0
    %286 = vmatpush2.msra.mxu0 0.0
    %287 = vmatprep.subr.mxu0 0.0
    %288 = vmatpush2.msra.mxu0 0.0
    %289 = vmatprep.subr.mxu0 0.0
    %290 = vmatpush2.msra.mxu0 0.0
    %291 = vmatprep.subr.mxu0 0.0
    %292 = vmatpush2.msra.mxu0 0.0
    %293 = vmatprep.subr.mxu0 0.0
    %294 = vmatpush2.msra.mxu0 0.0
    %295 = vmatprep.subr.mxu0 0.0
    %296 = vmatpush2.msra.mxu0 0.0
    %297 = vmatprep.subr.mxu0 0.0
    %298 = vmatpush2.msra.mxu0 0.0
    %299 = vmatprep.subr.mxu0 0.0
    %300 = vmatpush2.msra.mxu0 0.0
    %301 = vmatprep.subr.mxu0 0.0
    %302 = vmatpush2.msra.mxu0 0.0
    %303 = vmatprep.subr.mxu0 0.0
    %304 = vmatpush2.msra.mxu0 0.0
    %305 = vmatprep.subr.mxu0 0.0
    %306 = vmatpush2.msra.mxu0 0.0
    %307 = vmatprep.subr.mxu0 0.0
    %308 = vmatpush2.msra.mxu0 0.0
    %309 = vmatprep.subr.mxu0 0.0
    %310 = vmatpush2.msra.mxu0 0.0
    %311 = vmatprep.subr.mxu0 0.0
    %312 = vmatpush2.msra.mxu0 0.0
    %313 = vmatprep.subr.mxu0 0.0
    %314 = vmatpush2.msra.mxu0 0.0
    %315 = vmatprep.subr.mxu0 0.0
    %316 = vmatpush2.msra.mxu0 0.0
    %317 = vmatprep.mubr.f32.mxu0 0.0
    %318 = vmatmul.mubr.f32.gmra.mxu0 %v252
    %v319 = vpop.f32.mrf.mxu0
    %v320 = vadd.f32 0.0, %v319
    %v321 = vpop.f32.mrf.mxu0
    %322 = vdwg.mxu0
    %v324 = vrot.slane %v320, 6
    %v326 = vadd.f32 %v157, %v324
    %v327 = vtanh.pop %v326
    %v329 = vrot.slane %v327, 2
    %331 = vmatprep.subr.mxu0 0.0
    %332 = vmatpush1.msra.mxu0 %v180
    %333 = vmatprep.subr.mxu0 0.0
    %334 = vmatpush1.msra.mxu0 %v179
    %335 = vmatprep.subr.mxu0 0.0
    %336 = vmatpush1.msra.mxu0 %v178
    %337 = vmatprep.subr.mxu0 0.0
    %338 = vmatpush1.msra.mxu0 %v177
    %339 = vmatprep.subr.mxu0 0.0
    %340 = vmatpush1.msra.mxu0 %v176
    %341 = vmatprep.subr.mxu0 0.0
    %342 = vmatpush1.msra.mxu0 %v175
    %343 = vmatprep.subr.mxu0 0.0
    %344 = vmatpush1.msra.mxu0 %v174
    %345 = vmatprep.subr.mxu0 0.0
    %346 = vmatpush1.msra.mxu0 %v173
    %347 = vmatprep.subr.mxu0 0.0
    %348 = vmatpush1.msra.mxu0 %v172
    %349 = vmatprep.subr.mxu0 0.0
    %350 = vmatpush1.msra.mxu0 %v171
    %351 = vmatprep.subr.mxu0 0.0
    %352 = vmatpush1.msra.mxu0 %v170
    %353 = vmatprep.subr.mxu0 0.0
    %354 = vmatpush1.msra.mxu0 %v169
    %355 = vmatprep.subr.mxu0 0.0
    %356 = vmatpush1.msra.mxu0 %v168
    %357 = vmatprep.subr.mxu0 0.0
    %358 = vmatpush1.msra.mxu0 %v167
    %359 = vmatprep.subr.mxu0 0.0
    %360 = vmatpush1.msra.mxu0 %v166
    %361 = vmatprep.subr.mxu0 0.0
    %362 = vmatpush1.msra.mxu0 %v165
    %363 = vmatprep.subr.mxu0 0.0
    %364 = vmatpush2.msra.mxu0 0.0
    %365 = vmatprep.subr.mxu0 0.0
    %366 = vmatpush2.msra.mxu0 0.0
    %367 = vmatprep.subr.mxu0 0.0
    %368 = vmatpush2.msra.mxu0 0.0
    %369 = vmatprep.subr.mxu0 0.0
    %370 = vmatpush2.msra.mxu0 0.0
    %371 = vmatprep.subr.mxu0 0.0
    %372 = vmatpush2.msra.mxu0 0.0
    %373 = vmatprep.subr.mxu0 0.0
    %374 = vmatpush2.msra.mxu0 0.0
    %375 = vmatprep.subr.mxu0 0.0
    %376 = vmatpush2.msra.mxu0 0.0
    %377 = vmatprep.subr.mxu0 0.0
    %378 = vmatpush2.msra.mxu0 0.0
    %379 = vmatprep.subr.mxu0 0.0
    %380 = vmatpush2.msra.mxu0 0.0
    %381 = vmatprep.subr.mxu0 0.0
    %382 = vmatpush2.msra.mxu0 0.0
    %383 = vmatprep.subr.mxu0 0.0
    %384 = vmatpush2.msra.mxu0 0.0
    %385 = vmatprep.subr.mxu0 0.0
    %386 = vmatpush2.msra.mxu0 0.0
    %387 = vmatprep.subr.mxu0 0.0
    %388 = vmatpush2.msra.mxu0 0.0
    %389 = vmatprep.subr.mxu0 0.0
    %390 = vmatpush2.msra.mxu0 0.0
    %391 = vmatprep.subr.mxu0 0.0
    %392 = vmatpush2.msra.mxu0 0.0
    %393 = vmatprep.subr.mxu0 0.0
    %394 = vmatpush2.msra.mxu0 0.0
    %395 = vmatprep.mubr.f32.mxu0 0.0
    %396 = vmatmul.mubr.f32.gmra.mxu0 %v329
    %v397 = vpop.f32.mrf.mxu0
    %v398 = vadd.f32 0.0, %v397
    %v399 = vpop.f32.mrf.mxu0
    %400 = vdwg.mxu0
    %v402 = vrot.slane %v398, 4
    %v404 = vadd.f32 %v157, %v402
    %v405 = vtanh.pop %v404
    %v407 = vrot.slane %v405, 4
    %409 = vmatprep.subr.mxu0 0.0
    %410 = vmatpush1.msra.mxu0 %v180
    %411 = vmatprep.subr.mxu0 0.0
    %412 = vmatpush1.msra.mxu0 %v179
    %413 = vmatprep.subr.mxu0 0.0
    %414 = vmatpush1.msra.mxu0 %v178
    %415 = vmatprep.subr.mxu0 0.0
    %416 = vmatpush1.msra.mxu0 %v177
    %417 = vmatprep.subr.mxu0 0.0
    %418 = vmatpush1.msra.mxu0 %v176
    %419 = vmatprep.subr.mxu0 0.0
    %420 = vmatpush1.msra.mxu0 %v175
    %421 = vmatprep.subr.mxu0 0.0
    %422 = vmatpush1.msra.mxu0 %v174
    %423 = vmatprep.subr.mxu0 0.0
    %424 = vmatpush1.msra.mxu0 %v173
    %425 = vmatprep.subr.mxu0 0.0
    %426 = vmatpush1.msra.mxu0 %v172
    %427 = vmatprep.subr.mxu0 0.0
    %428 = vmatpush1.msra.mxu0 %v171
    %429 = vmatprep.subr.mxu0 0.0
    %430 = vmatpush1.msra.mxu0 %v170
    %431 = vmatprep.subr.mxu0 0.0
    %432 = vmatpush1.msra.mxu0 %v169
    %433 = vmatprep.subr.mxu0 0.0
    %434 = vmatpush1.msra.mxu0 %v168
    %435 = vmatprep.subr.mxu0 0.0
    %436 = vmatpush1.msra.mxu0 %v167
    %437 = vmatprep.subr.mxu0 0.0
    %438 = vmatpush1.msra.mxu0 %v166
    %439 = vmatprep.subr.mxu0 0.0
    %440 = vmatpush1.msra.mxu0 %v165
    %441 = vmatprep.subr.mxu0 0.0
    %442 = vmatpush2.msra.mxu0 0.0
    %443 = vmatprep.subr.mxu0 0.0
    %444 = vmatpush2.msra.mxu0 0.0
    %445 = vmatprep.subr.mxu0 0.0
    %446 = vmatpush2.msra.mxu0 0.0
    %447 = vmatprep.subr.mxu0 0.0
    %448 = vmatpush2.msra.mxu0 0.0
    %449 = vmatprep.subr.mxu0 0.0
    %450 = vmatpush2.msra.mxu0 0.0
    %451 = vmatprep.subr.mxu0 0.0
    %452 = vmatpush2.msra.mxu0 0.0
    %453 = vmatprep.subr.mxu0 0.0
    %454 = vmatpush2.msra.mxu0 0.0
    %455 = vmatprep.subr.mxu0 0.0
    %456 = vmatpush2.msra.mxu0 0.0
    %457 = vmatprep.subr.mxu0 0.0
    %458 = vmatpush2.msra.mxu0 0.0
    %459 = vmatprep.subr.mxu0 0.0
    %460 = vmatpush2.msra.mxu0 0.0
    %461 = vmatprep.subr.mxu0 0.0
    %462 = vmatpush2.msra.mxu0 0.0
    %463 = vmatprep.subr.mxu0 0.0
    %464 = vmatpush2.msra.mxu0 0.0
    %465 = vmatprep.subr.mxu0 0.0
    %466 = vmatpush2.msra.mxu0 0.0
    %467 = vmatprep.subr.mxu0 0.0
    %468 = vmatpush2.msra.mxu0 0.0
    %469 = vmatprep.subr.mxu0 0.0
    %470 = vmatpush2.msra.mxu0 0.0
    %471 = vmatprep.subr.mxu0 0.0
    %472 = vmatpush2.msra.mxu0 0.0
    %473 = vmatprep.mubr.f32.mxu0 0.0
    %474 = vmatmul.mubr.f32.gmra.mxu0 %v407
    %v475 = vpop.f32.mrf.mxu0
    %v476 = vadd.f32 0.0, %v475
    %v477 = vpop.f32.mrf.mxu0
    %478 = vdwg.mxu0
    %v480 = vrot.slane %v476, 2
    %v482 = vadd.f32 %v157, %v480
    %v483 = vtanh.pop %v482
    %v485 = vrot.slane %v483, 6
    %487 = vmatprep.subr.mxu0 0.0
    %488 = vmatpush1.msra.mxu0 %v180
    %489 = vmatprep.subr.mxu0 0.0
    %490 = vmatpush1.msra.mxu0 %v179
    %491 = vmatprep.subr.mxu0 0.0
    %492 = vmatpush1.msra.mxu0 %v178
    %493 = vmatprep.subr.mxu0 0.0
    %494 = vmatpush1.msra.mxu0 %v177
    %495 = vmatprep.subr.mxu0 0.0
    %496 = vmatpush1.msra.mxu0 %v176
    %497 = vmatprep.subr.mxu0 0.0
    %498 = vmatpush1.msra.mxu0 %v175
    %499 = vmatprep.subr.mxu0 0.0
    %500 = vmatpush1.msra.mxu0 %v174
    %501 = vmatprep.subr.mxu0 0.0
    %502 = vmatpush1.msra.mxu0 %v173
    %503 = vmatprep.subr.mxu0 0.0
    %504 = vmatpush1.msra.mxu0 %v172
    %505 = vmatprep.subr.mxu0 0.0
    %506 = vmatpush1.msra.mxu0 %v171
    %507 = vmatprep.subr.mxu0 0.0
    %508 = vmatpush1.msra.mxu0 %v170
    %509 = vmatprep.subr.mxu0 0.0
    %510 = vmatpush1.msra.mxu0 %v169
    %511 = vmatprep.subr.mxu0 0.0
    %512 = vmatpush1.msra.mxu0 %v168
    %513 = vmatprep.subr.mxu0 0.0
    %514 = vmatpush1.msra.mxu0 %v167
    %515 = vmatprep.subr.mxu0 0.0
    %516 = vmatpush1.msra.mxu0 %v166
    %517 = vmatprep.subr.mxu0 0.0
    %518 = vmatpush1.msra.mxu0 %v165
    %519 = vmatprep.subr.mxu0 0.0
    %520 = vmatpush2.msra.mxu0 0.0
    %521 = vmatprep.subr.mxu0 0.0
    %522 = vmatpush2.msra.mxu0 0.0
    %523 = vmatprep.subr.mxu0 0.0
    %524 = vmatpush2.msra.mxu0 0.0
    %525 = vmatprep.subr.mxu0 0.0
    %526 = vmatpush2.msra.mxu0 0.0
    %527 = vmatprep.subr.mxu0 0.0
    %528 = vmatpush2.msra.mxu0 0.0
    %529 = vmatprep.subr.mxu0 0.0
    %530 = vmatpush2.msra.mxu0 0.0
    %531 = vmatprep.subr.mxu0 0.0
    %532 = vmatpush2.msra.mxu0 0.0
    %533 = vmatprep.subr.mxu0 0.0
    %534 = vmatpush2.msra.mxu0 0.0
    %535 = vmatprep.subr.mxu0 0.0
    %536 = vmatpush2.msra.mxu0 0.0
    %537 = vmatprep.subr.mxu0 0.0
    %538 = vmatpush2.msra.mxu0 0.0
    %539 = vmatprep.subr.mxu0 0.0
    %540 = vmatpush2.msra.mxu0 0.0
    %541 = vmatprep.subr.mxu0 0.0
    %542 = vmatpush2.msra.mxu0 0.0
    %543 = vmatprep.subr.mxu0 0.0
    %544 = vmatpush2.msra.mxu0 0.0
    %545 = vmatprep.subr.mxu0 0.0
    %546 = vmatpush2.msra.mxu0 0.0
    %547 = vmatprep.subr.mxu0 0.0
    %548 = vmatpush2.msra.mxu0 0.0
    %549 = vmatprep.subr.mxu0 0.0
    %550 = vmatpush2.msra.mxu0 0.0
    %551 = vmatprep.mubr.f32.mxu0 0.0
    %552 = vmatmul.mubr.f32.gmra.mxu0 %v485
    %v553 = vpop.f32.mrf.mxu0
    %v554 = vadd.f32 0.0, %v553
    %v555 = vpop.f32.mrf.mxu0
    %556 = vdwg.mxu0
    %v557 = vadd.f32 %v162, %v554
    %v558 = vtanh.pop %v557
    %559 = vmatprep.subr.mxu0 0.0
    %560 = vmatpush1.msra.mxu0 %v180
    %561 = vmatprep.subr.mxu0 0.0
    %562 = vmatpush1.msra.mxu0 %v179
    %563 = vmatprep.subr.mxu0 0.0
    %564 = vmatpush1.msra.mxu0 %v178
    %565 = vmatprep.subr.mxu0 0.0
    %566 = vmatpush1.msra.mxu0 %v177
    %567 = vmatprep.subr.mxu0 0.0
    %568 = vmatpush1.msra.mxu0 %v176
    %569 = vmatprep.subr.mxu0 0.0
    %570 = vmatpush1.msra.mxu0 %v175
    %571 = vmatprep.subr.mxu0 0.0
    %572 = vmatpush1.msra.mxu0 %v174
    %573 = vmatprep.subr.mxu0 0.0
    %574 = vmatpush1.msra.mxu0 %v173
    %575 = vmatprep.subr.mxu0 0.0
    %576 = vmatpush1.msra.mxu0 %v172
    %577 = vmatprep.subr.mxu0 0.0
    %578 = vmatpush1.msra.mxu0 %v171
    %579 = vmatprep.subr.mxu0 0.0
    %580 = vmatpush1.msra.mxu0 %v170
    %581 = vmatprep.subr.mxu0 0.0
    %582 = vmatpush1.msra.mxu0 %v169
    %583 = vmatprep.subr.mxu0 0.0
    %584 = vmatpush1.msra.mxu0 %v168
    %585 = vmatprep.subr.mxu0 0.0
    %586 = vmatpush1.msra.mxu0 %v167
    %587 = vmatprep.subr.mxu0 0.0
    %588 = vmatpush1.msra.mxu0 %v166
    %589 = vmatprep.subr.mxu0 0.0
    %590 = vmatpush1.msra.mxu0 %v165
    %591 = vmatprep.subr.mxu0 0.0
    %592 = vmatpush2.msra.mxu0 0.0
    %593 = vmatprep.subr.mxu0 0.0
    %594 = vmatpush2.msra.mxu0 0.0
    %595 = vmatprep.subr.mxu0 0.0
    %596 = vmatpush2.msra.mxu0 0.0
    %597 = vmatprep.subr.mxu0 0.0
    %598 = vmatpush2.msra.mxu0 0.0
    %599 = vmatprep.subr.mxu0 0.0
    %600 = vmatpush2.msra.mxu0 0.0
    %601 = vmatprep.subr.mxu0 0.0
    %602 = vmatpush2.msra.mxu0 0.0
    %603 = vmatprep.subr.mxu0 0.0
    %604 = vmatpush2.msra.mxu0 0.0
    %605 = vmatprep.subr.mxu0 0.0
    %606 = vmatpush2.msra.mxu0 0.0
    %607 = vmatprep.subr.mxu0 0.0
    %608 = vmatpush2.msra.mxu0 0.0
    %609 = vmatprep.subr.mxu0 0.0
    %610 = vmatpush2.msra.mxu0 0.0
    %611 = vmatprep.subr.mxu0 0.0
    %612 = vmatpush2.msra.mxu0 0.0
    %613 = vmatprep.subr.mxu0 0.0
    %614 = vmatpush2.msra.mxu0 0.0
    %615 = vmatprep.subr.mxu0 0.0
    %616 = vmatpush2.msra.mxu0 0.0
    %617 = vmatprep.subr.mxu0 0.0
    %618 = vmatpush2.msra.mxu0 0.0
    %619 = vmatprep.subr.mxu0 0.0
    %620 = vmatpush2.msra.mxu0 0.0
    %621 = vmatprep.subr.mxu0 0.0
    %622 = vmatpush2.msra.mxu0 0.0
    %623 = vmatprep.mubr.f32.mxu0 0.0
    %624 = vmatmul.mubr.f32.gmra.mxu0 %v558
    %v625 = vpop.f32.mrf.mxu0
    %v626 = vadd.f32 0.0, %v625
    %v627 = vpop.f32.mrf.mxu0
    %628 = vdwg.mxu0
    %v630 = vrot.slane %v626, 6
    %v632 = vadd.f32 %v162, %v630
    %v633 = vtanh.pop %v632
    %v635 = vrot.slane %v633, 2
    %637 = vmatprep.subr.mxu0 0.0
    %638 = vmatpush1.msra.mxu0 %v180
    %639 = vmatprep.subr.mxu0 0.0
    %640 = vmatpush1.msra.mxu0 %v179
    %641 = vmatprep.subr.mxu0 0.0
    %642 = vmatpush1.msra.mxu0 %v178
    %643 = vmatprep.subr.mxu0 0.0
    %644 = vmatpush1.msra.mxu0 %v177
    %645 = vmatprep.subr.mxu0 0.0
    %646 = vmatpush1.msra.mxu0 %v176
    %647 = vmatprep.subr.mxu0 0.0
    %648 = vmatpush1.msra.mxu0 %v175
    %649 = vmatprep.subr.mxu0 0.0
    %650 = vmatpush1.msra.mxu0 %v174
    %651 = vmatprep.subr.mxu0 0.0
    %652 = vmatpush1.msra.mxu0 %v173
    %653 = vmatprep.subr.mxu0 0.0
    %654 = vmatpush1.msra.mxu0 %v172
    %655 = vmatprep.subr.mxu0 0.0
    %656 = vmatpush1.msra.mxu0 %v171
    %657 = vmatprep.subr.mxu0 0.0
    %658 = vmatpush1.msra.mxu0 %v170
    %659 = vmatprep.subr.mxu0 0.0
    %660 = vmatpush1.msra.mxu0 %v169
    %661 = vmatprep.subr.mxu0 0.0
    %662 = vmatpush1.msra.mxu0 %v168
    %663 = vmatprep.subr.mxu0 0.0
    %664 = vmatpush1.msra.mxu0 %v167
    %665 = vmatprep.subr.mxu0 0.0
    %666 = vmatpush1.msra.mxu0 %v166
    %667 = vmatprep.subr.mxu0 0.0
    %668 = vmatpush1.msra.mxu0 %v165
    %669 = vmatprep.subr.mxu0 0.0
    %670 = vmatpush2.msra.mxu0 0.0
    %671 = vmatprep.subr.mxu0 0.0
    %672 = vmatpush2.msra.mxu0 0.0
    %673 = vmatprep.subr.mxu0 0.0
    %674 = vmatpush2.msra.mxu0 0.0
    %675 = vmatprep.subr.mxu0 0.0
    %676 = vmatpush2.msra.mxu0 0.0
    %677 = vmatprep.subr.mxu0 0.0
    %678 = vmatpush2.msra.mxu0 0.0
    %679 = vmatprep.subr.mxu0 0.0
    %680 = vmatpush2.msra.mxu0 0.0
    %681 = vmatprep.subr.mxu0 0.0
    %682 = vmatpush2.msra.mxu0 0.0
    %683 = vmatprep.subr.mxu0 0.0
    %684 = vmatpush2.msra.mxu0 0.0
    %685 = vmatprep.subr.mxu0 0.0
    %686 = vmatpush2.msra.mxu0 0.0
    %687 = vmatprep.subr.mxu0 0.0
    %688 = vmatpush2.msra.mxu0 0.0
    %689 = vmatprep.subr.mxu0 0.0
    %690 = vmatpush2.msra.mxu0 0.0
    %691 = vmatprep.subr.mxu0 0.0
    %692 = vmatpush2.msra.mxu0 0.0
    %693 = vmatprep.subr.mxu0 0.0
    %694 = vmatpush2.msra.mxu0 0.0
    %695 = vmatprep.subr.mxu0 0.0
    %696 = vmatpush2.msra.mxu0 0.0
    %697 = vmatprep.subr.mxu0 0.0
    %698 = vmatpush2.msra.mxu0 0.0
    %699 = vmatprep.subr.mxu0 0.0
    %700 = vmatpush2.msra.mxu0 0.0
    %701 = vmatprep.mubr.f32.mxu0 0.0
    %702 = vmatmul.mubr.f32.gmra.mxu0 %v635
    %v703 = vpop.f32.mrf.mxu0
    %v704 = vadd.f32 0.0, %v703
    %v705 = vpop.f32.mrf.mxu0
    %706 = vdwg.mxu0
    %v708 = vrot.slane %v704, 4
    %v710 = vadd.f32 %v162, %v708
    %v711 = vtanh.pop %v710
    %v713 = vrot.slane %v711, 4
    %715 = vmatprep.subr.mxu0 0.0
    %716 = vmatpush1.msra.mxu0 %v180
    %717 = vmatprep.subr.mxu0 0.0
    %718 = vmatpush1.msra.mxu0 %v179
    %719 = vmatprep.subr.mxu0 0.0
    %720 = vmatpush1.msra.mxu0 %v178
    %721 = vmatprep.subr.mxu0 0.0
    %722 = vmatpush1.msra.mxu0 %v177
    %723 = vmatprep.subr.mxu0 0.0
    %724 = vmatpush1.msra.mxu0 %v176
    %725 = vmatprep.subr.mxu0 0.0
    %726 = vmatpush1.msra.mxu0 %v175
    %727 = vmatprep.subr.mxu0 0.0
    %728 = vmatpush1.msra.mxu0 %v174
    %729 = vmatprep.subr.mxu0 0.0
    %730 = vmatpush1.msra.mxu0 %v173
    %731 = vmatprep.subr.mxu0 0.0
    %732 = vmatpush1.msra.mxu0 %v172
    %733 = vmatprep.subr.mxu0 0.0
    %734 = vmatpush1.msra.mxu0 %v171
    %735 = vmatprep.subr.mxu0 0.0
    %736 = vmatpush1.msra.mxu0 %v170
    %737 = vmatprep.subr.mxu0 0.0
    %738 = vmatpush1.msra.mxu0 %v169
    %739 = vmatprep.subr.mxu0 0.0
    %740 = vmatpush1.msra.mxu0 %v168
    %741 = vmatprep.subr.mxu0 0.0
    %742 = vmatpush1.msra.mxu0 %v167
    %743 = vmatprep.subr.mxu0 0.0
    %744 = vmatpush1.msra.mxu0 %v166
    %745 = vmatprep.subr.mxu0 0.0
    %746 = vmatpush1.msra.mxu0 %v165
    %747 = vmatprep.subr.mxu0 0.0
    %748 = vmatpush2.msra.mxu0 0.0
    %749 = vmatprep.subr.mxu0 0.0
    %750 = vmatpush2.msra.mxu0 0.0
    %751 = vmatprep.subr.mxu0 0.0
    %752 = vmatpush2.msra.mxu0 0.0
    %753 = vmatprep.subr.mxu0 0.0
    %754 = vmatpush2.msra.mxu0 0.0
    %755 = vmatprep.subr.mxu0 0.0
    %756 = vmatpush2.msra.mxu0 0.0
    %757 = vmatprep.subr.mxu0 0.0
    %758 = vmatpush2.msra.mxu0 0.0
    %759 = vmatprep.subr.mxu0 0.0
    %760 = vmatpush2.msra.mxu0 0.0
    %761 = vmatprep.subr.mxu0 0.0
    %762 = vmatpush2.msra.mxu0 0.0
    %763 = vmatprep.subr.mxu0 0.0
    %764 = vmatpush2.msra.mxu0 0.0
    %765 = vmatprep.subr.mxu0 0.0
    %766 = vmatpush2.msra.mxu0 0.0
    %767 = vmatprep.subr.mxu0 0.0
    %768 = vmatpush2.msra.mxu0 0.0
    %769 = vmatprep.subr.mxu0 0.0
    %770 = vmatpush2.msra.mxu0 0.0
    %771 = vmatprep.subr.mxu0 0.0
    %772 = vmatpush2.msra.mxu0 0.0
    %773 = vmatprep.subr.mxu0 0.0
    %774 = vmatpush2.msra.mxu0 0.0
    %775 = vmatprep.subr.mxu0 0.0
    %776 = vmatpush2.msra.mxu0 0.0
    %777 = vmatprep.subr.mxu0 0.0
    %778 = vmatpush2.msra.mxu0 0.0
    %779 = vmatprep.mubr.f32.mxu0 0.0
    %780 = vmatmul.mubr.f32.gmra.mxu0 %v713
    %v781 = vpop.f32.mrf.mxu0
    %v782 = vadd.f32 0.0, %v781
    %v783 = vpop.f32.mrf.mxu0
    %784 = vdwg.mxu0
    %v786 = vrot.slane %v782, 2
    %v788 = vadd.f32 %v162, %v786
    %v789 = vtanh.pop %v788
    %v790 = vld [vmem:[#allocation7] sm:$0xff]
    %v791 = vld [vmem:[#allocation7 + $0x8] sm:$0xff]
    %v792 = vld [vmem:[#allocation7 + $0x10] sm:$0xff]
    %v793 = vld [vmem:[#allocation7 + $0x18] sm:$0xff]
    %v794 = vld [vmem:[#allocation7 + $0x20] sm:$0xff]
    %v795 = vld [vmem:[#allocation7 + $0x28] sm:$0xff]
    %v796 = vld [vmem:[#allocation7 + $0x30] sm:$0xff]
    %v797 = vld [vmem:[#allocation7 + $0x38] sm:$0xff]
    %v798 = vld [vmem:[#allocation7 + $0x40] sm:$0xff]
    %v799 = vld [vmem:[#allocation7 + $0x48] sm:$0xff]
    %v800 = vld [vmem:[#allocation7 + $0x50] sm:$0xff]
    %v801 = vld [vmem:[#allocation7 + $0x58] sm:$0xff]
    %v802 = vld [vmem:[#allocation7 + $0x60] sm:$0xff]
    %v803 = vld [vmem:[#allocation7 + $0x68] sm:$0xff]
    %v804 = vld [vmem:[#allocation7 + $0x70] sm:$0xff]
    %v805 = vld [vmem:[#allocation7 + $0x78] sm:$0xff]
    %v806 = vld [vmem:[%s5] sm:$0x1]
    %v808 = vlaneseq
    %v809 = vshrl.u32 %v808, 7
    %v810 = vsub.s32 0, %v809
    %v811 = vrot.slane %v806, %v810
    %v814 = vrot.slane %v789, 6
    %816 = vmatprep.subr.mxu0 0.0
    %817 = vmatpush1.msra.mxu0 %v805
    %818 = vmatprep.subr.mxu0 0.0
    %819 = vmatpush1.msra.mxu0 %v804
    %820 = vmatprep.subr.mxu0 0.0
    %821 = vmatpush1.msra.mxu0 %v803
    %822 = vmatprep.subr.mxu0 0.0
    %823 = vmatpush1.msra.mxu0 %v802
    %824 = vmatprep.subr.mxu0 0.0
    %825 = vmatpush1.msra.mxu0 %v801
    %826 = vmatprep.subr.mxu0 0.0
    %827 = vmatpush1.msra.mxu0 %v800
    %828 = vmatprep.subr.mxu0 0.0
    %829 = vmatpush1.msra.mxu0 %v799
    %830 = vmatprep.subr.mxu0 0.0
    %831 = vmatpush1.msra.mxu0 %v798
    %832 = vmatprep.subr.mxu0 0.0
    %833 = vmatpush1.msra.mxu0 %v797
    %834 = vmatprep.subr.mxu0 0.0
    %835 = vmatpush1.msra.mxu0 %v796
    %836 = vmatprep.subr.mxu0 0.0
    %837 = vmatpush1.msra.mxu0 %v795
    %838 = vmatprep.subr.mxu0 0.0
    %839 = vmatpush1.msra.mxu0 %v794
    %840 = vmatprep.subr.mxu0 0.0
    %841 = vmatpush1.msra.mxu0 %v793
    %842 = vmatprep.subr.mxu0 0.0
    %843 = vmatpush1.msra.mxu0 %v792
    %844 = vmatprep.subr.mxu0 0.0
    %845 = vmatpush1.msra.mxu0 %v791
    %846 = vmatprep.subr.mxu0 0.0
    %847 = vmatpush1.msra.mxu0 %v790
    %848 = vmatprep.subr.mxu0 0.0
    %849 = vmatpush2.msra.mxu0 0.0
    %850 = vmatprep.subr.mxu0 0.0
    %851 = vmatpush2.msra.mxu0 0.0
    %852 = vmatprep.subr.mxu0 0.0
    %853 = vmatpush2.msra.mxu0 0.0
    %854 = vmatprep.subr.mxu0 0.0
    %855 = vmatpush2.msra.mxu0 0.0
    %856 = vmatprep.subr.mxu0 0.0
    %857 = vmatpush2.msra.mxu0 0.0
    %858 = vmatprep.subr.mxu0 0.0
    %859 = vmatpush2.msra.mxu0 0.0
    %860 = vmatprep.subr.mxu0 0.0
    %861 = vmatpush2.msra.mxu0 0.0
    %862 = vmatprep.subr.mxu0 0.0
    %863 = vmatpush2.msra.mxu0 0.0
    %864 = vmatprep.subr.mxu0 0.0
    %865 = vmatpush2.msra.mxu0 0.0
    %866 = vmatprep.subr.mxu0 0.0
    %867 = vmatpush2.msra.mxu0 0.0
    %868 = vmatprep.subr.mxu0 0.0
    %869 = vmatpush2.msra.mxu0 0.0
    %870 = vmatprep.subr.mxu0 0.0
    %871 = vmatpush2.msra.mxu0 0.0
    %872 = vmatprep.subr.mxu0 0.0
    %873 = vmatpush2.msra.mxu0 0.0
    %874 = vmatprep.subr.mxu0 0.0
    %875 = vmatpush2.msra.mxu0 0.0
    %876 = vmatprep.subr.mxu0 0.0
    %877 = vmatpush2.msra.mxu0 0.0
    %878 = vmatprep.subr.mxu0 0.0
    %879 = vmatpush2.msra.mxu0 0.0
    %880 = vmatprep.mubr.f32.mxu0 0.0
    %881 = vmatmul.mubr.f32.gmra.mxu0 %v814
    %v882 = vpop.f32.mrf.mxu0
    %v883 = vadd.f32 %v811, %v882
    %v884 = vpop.f32.mrf.mxu0
    %885 = vdwg.mxu0
    %886 = vst [vmem:[#allocation8] sm:$0x3] %v883
    // Predicated region
    $region38: #{rnn_model_forward.1} parent=1 // pred_check
      _
    $region39: #{rnn_model_forward.1} parent=1 // pred_check_branch
      %888 = sbr.rel (0) target = $region41
    $region40: #{rnn_model_forward.1} parent=1 // pred_region
      %s890 = ssub.s32 32, 32
      %891 = vsyncadd [#allocation4], %s890
      %s893 = sshll.u32 [#allocation8], 4
      %s894 = int_to_ptr.vmem [resolvable:$true] %s893
      %896 = dma.vmem_to_hbm [thread:$0]  %s894, 32, %s6, [#allocation4]
    $region41: #{rnn_model_forward.1} parent=1 // pred_fallthru
      _
    // Predicated region
    $region42: #{rnn_model_forward.1} parent=1 // pred_check
      _
    $region43: #{rnn_model_forward.1} parent=1 // pred_check_branch
      %898 = sbr.rel (0) target = $region45
    $region44: #{rnn_model_forward.1} parent=1 // pred_region
      %899 = dma.done [#allocation4], 32
    $region45: #{rnn_model_forward.1} parent=1 // pred_fallthru
      _
    %900 = vsyncpa [#allocation3], 1
    %901 = vsyncpa [#allocation6], 1
    %902 = vsyncpa [#allocation4], 1

</llo_original>
